<compile_context>
chip_gen: v7x
topology: tpu7x:2x2x1
jax: 0.10.0
libtpu: 0.0.40
codegen_flags: <defaults>
</compile_context>

<pallas_src>
import functools
import math

import jax
import jax.numpy as jnp
from jax.experimental import pallas as pl
from jax.experimental.pallas import tpu as pltpu


# --------------------------------------------------------------------------
# helpers (traced inside kernels, all f32)
# --------------------------------------------------------------------------
def _layernorm_f32(x, gamma, beta, eps):
    mu = jnp.mean(x, axis=-1, keepdims=True)
    var = jnp.mean(jnp.square(x - mu), axis=-1, keepdims=True)
    return (x - mu) * jax.lax.rsqrt(var + eps) * gamma + beta


def _gelu_new_f32(x):
    c = math.sqrt(2.0 / math.pi)
    return 0.5 * x * (1.0 + jnp.tanh(c * (x + 0.044715 * x * x * x)))


def _vmem_limit_bytes():
    """~100 MiB on 128-MiB chips (v5e/v6e), ~54 MiB on v7x (64 MiB physical)."""
    try:
        cap = int(pltpu.get_tpu_info().vmem_capacity_bytes)
    except Exception:
        cap = 64 * 1024 * 1024  # conservative fallback, safe on every generation
    return min(100 * 1024 * 1024, int(cap * 0.85))


# --------------------------------------------------------------------------
# Kernel 1: embedding_hidden_mapping_in  (y = x @ W + b), grid over batch
# --------------------------------------------------------------------------
def _emb_map_kernel(x_ref, w_ref, b_ref, o_ref):
    x = x_ref[0].astype(jnp.bfloat16)                        # (S, E)
    y = jnp.dot(x, w_ref[...], preferred_element_type=jnp.float32)
    o_ref[0] = (y + b_ref[...].astype(jnp.float32)).astype(o_ref.dtype)


def embedding_mapping(x, w, b):
    """x: (B, S, E) f32; w: (E, H) bf16; b: (1, H) f32 -> (B, S, H) f32."""
    B, S, E = x.shape
    H = w.shape[1]
    return pl.pallas_call(
        _emb_map_kernel,
        out_shape=jax.ShapeDtypeStruct((B, S, H), jnp.float32),
        grid=(B,),
        in_specs=[
            pl.BlockSpec((1, S, E), lambda b_: (b_, 0, 0)),
            pl.BlockSpec((E, H), lambda b_: (0, 0)),
            pl.BlockSpec((1, H), lambda b_: (0, 0)),
        ],
        out_specs=pl.BlockSpec((1, S, H), lambda b_: (b_, 0, 0)),
        compiler_params=pltpu.CompilerParams(
            dimension_semantics=("parallel",),
            vmem_limit_bytes=_vmem_limit_bytes()),
    )(x, w, b)


# --------------------------------------------------------------------------
# Kernel 2: whole ALBERT layer stack, grid = (batch, layer)
# --------------------------------------------------------------------------
def _albert_stack_kernel(widx_ref,                 # SMEM (L,) int32 (scalar prefetch)
                         h_ref, m_ref,
                         qkvw_ref, qkvb_ref,
                         aow_ref, aob_ref, alg_ref, alb_ref,
                         fw_ref, fb_ref, fow_ref, fob_ref,
                         flg_ref, flb_ref,
                         o_ref,
                         h_carry, qkv_scr, ctx_scr,
                         *, num_heads, eps):
    del widx_ref  # only used by the index_maps
    f32 = jnp.float32
    bf16 = jnp.bfloat16

    layer = pl.program_id(1)
    S, H = h_carry.shape
    Dh = H // num_heads

    # First layer of this batch element: pull the embedding-mapped hidden into VMEM.
    @pl.when(layer == 0)
    def _():
        h_carry[...] = h_ref[0].astype(f32)

    h = h_carry[...]                                          # (S, H) f32

    def mm(x_f32, w2d):
        # bf16 MXU operands, f32 accumulation.
        return jnp.dot(x_f32.astype(bf16), w2d, preferred_element_type=f32)

    # ---- fused QKV projection (1/sqrt(Dh) folded into Q weights/bias) -------------
    qkv = mm(h, qkvw_ref[0]) + qkvb_ref[0].astype(f32)        # (S, 3H) f32
    qkv_scr[...] = qkv.astype(bf16)                           # bf16 slab in VMEM

    # Hoisted additive-mask broadcast: one (1,S)->(S,S) broadcast per layer step.
    mask_sq = jnp.broadcast_to(m_ref[0].astype(f32), (S, S))

    # ---- per-head attention: each head's context stored straight into ctx_scr -----
    # TODO(synk): lax.fori_loop + pl.ds lane offsets would bound live ranges tighter,
    # but dynamic minor(lane)-dim slicing is not reliably lowered by Mosaic; the head
    # count is small, so we unroll with static lane offsets and let the per-head
    # (S, S) score/prob tensors die at the scratch store.
    # TODO(synk): per-head head_mask multiplication omitted (entries are None -> identity).
    for hh in range(num_heads):
        lo = hh * Dh
        qh = qkv_scr[:, lo:lo + Dh]                           # bf16 (S, Dh)
        kh = qkv_scr[:, H + lo:H + lo + Dh]
        vh = qkv_scr[:, 2 * H + lo:2 * H + lo + Dh]
        # Q @ K^T without materializing K^T (contract on Dh of both operands).
        s = jax.lax.dot_general(qh, kh, (((1,), (1,)), ((), ())),
                                preferred_element_type=f32)   # (S, S)
        s = s + mask_sq
        s = s - jnp.max(s, axis=-1, keepdims=True)
        p = jnp.exp(s)
        p = p * pl.reciprocal(jnp.sum(p, axis=-1, keepdims=True), approx=False)
        ctx_scr[:, lo:lo + Dh] = jnp.dot(p.astype(bf16), vh,
                                         preferred_element_type=f32)

    # ---- attention output projection (lane-dense, K = H) + residual + LayerNorm ---
    proj = mm(ctx_scr[...], aow_ref[0]) + aob_ref[0].astype(f32)
    attn_out = _layernorm_f32(proj + h, alg_ref[0].astype(f32),
                              alb_ref[0].astype(f32), eps)

    # ---- FFN (gelu_new) + residual + LayerNorm -------------------------------------
    # TODO(synk): for ALBERT-xlarge/xxlarge on v7x (64 MiB VMEM) tile the FFN over the
    # intermediate dimension instead of keeping (H,I)/(I,H) weights fully resident.
    y = mm(attn_out, fw_ref[0]) + fb_ref[0].astype(f32)       # (S, I)
    y = _gelu_new_f32(y)
    y = mm(y, fow_ref[0]) + fob_ref[0].astype(f32)            # (S, H)
    out = _layernorm_f32(y + attn_out, flg_ref[0].astype(f32),
                         flb_ref[0].astype(f32), eps)

    h_carry[...] = out                                        # carry to next layer

    @pl.when(layer == pl.num_programs(1) - 1)
    def _():
        o_ref[0] = out.astype(o_ref.dtype)


def _layer_weight_table(cfg):
    """Layer-invocation -> weight-set index table (matches the PyTorch group loop)."""
    n_layers = cfg["num_hidden_layers"]
    n_groups = cfg["num_hidden_groups"]
    inner = cfg["inner_group_num"]
    idx = []
    for i in range(n_layers):
        g = int(i / (n_layers / n_groups))
        for j in range(inner):
            idx.append(g * inner + j)
    return jnp.asarray(idx, dtype=jnp.int32)


def albert_layer_stack(h, mask_add, stack, cfg):
    """h: (B, S, H) f32; mask_add: (B, 1, S) f32 additive -> (B, S, H) f32."""
    B, S, H = h.shape
    I = cfg["intermediate_size"]
    nH = cfg["num_attention_heads"]
    eps = cfg["layer_norm_eps"]

    widx = _layer_weight_table(cfg)
    L = int(widx.shape[0])

    batch_spec = lambda shp: pl.BlockSpec(shp, lambda b, l, w: (b, 0, 0))
    # Weight block index only depends on the layer axis; for shared weights
    # (num_hidden_groups == 1) the index is constant, so the blocks are never re-DMA'd.
    # TODO(synk): single-buffer the constant-index weight specs (pl.Buffered(1)) to
    # halve their VMEM footprint once verified on the target jax/Mosaic version.
    weight_spec = lambda shp: pl.BlockSpec(shp, lambda b, l, w: (w[l], 0, 0))

    grid_spec = pltpu.PrefetchScalarGridSpec(
        num_scalar_prefetch=1,
        grid=(B, L),
        in_specs=[
            batch_spec((1, S, H)),                              # hidden (read at layer 0)
            batch_spec((1, 1, S)),                              # additive attention mask
            weight_spec((1, H, 3 * H)), weight_spec((1, 1, 3 * H)),   # fused QKV
            weight_spec((1, H, H)), weight_spec((1, 1, H)),            # attn out proj
            weight_spec((1, 1, H)), weight_spec((1, 1, H)),            # attn LayerNorm
            weight_spec((1, H, I)), weight_spec((1, 1, I)),            # ffn
            weight_spec((1, I, H)), weight_spec((1, 1, H)),            # ffn out
            weight_spec((1, 1, H)), weight_spec((1, 1, H)),            # full LayerNorm
        ],
        out_specs=batch_spec((1, S, H)),
        scratch_shapes=[
            pltpu.VMEM((S, H), jnp.float32),       # hidden carried across layers
            pltpu.VMEM((S, 3 * H), jnp.bfloat16),  # fused QKV slab (bf16)
            pltpu.VMEM((S, H), jnp.float32),       # per-head context, lane-dense
        ],
    )

    kernel = functools.partial(_albert_stack_kernel, num_heads=nH, eps=eps)
    return pl.pallas_call(
        kernel,
        out_shape=jax.ShapeDtypeStruct((B, S, H), jnp.float32),
        grid_spec=grid_spec,
        compiler_params=pltpu.CompilerParams(
            dimension_semantics=("parallel", "arbitrary"),
            vmem_limit_bytes=_vmem_limit_bytes()),
    )(widx, h, mask_add,
      stack["qkv_w"], stack["qkv_b"], stack["ao_w"], stack["ao_b"],
      stack["al_g"], stack["al_b"], stack["f_w"], stack["f_b"],
      stack["fo_w"], stack["fo_b"], stack["fl_g"], stack["fl_b"])


# --------------------------------------------------------------------------
# Parameter construction (deterministic, synthetic)
#   matmul weights bf16 (MXU operands), biases & LayerNorm params f32,
#   weight sets stacked on a leading axis, 1/sqrt(Dh) folded into Q.
# --------------------------------------------------------------------------
def make_params(key, cfg):
    H, E, I = cfg["hidden_size"], cfg["embedding_size"], cfg["intermediate_size"]
    nH = cfg["num_attention_heads"]
    Dh = H // nH
    W = cfg["num_hidden_groups"] * cfg["inner_group_num"]
    q_scale = 1.0 / math.sqrt(Dh)

    def dense(key_, fan_in, fan_out, w_scale=1.0):
        kw, kb = jax.random.split(key_)
        w = jax.random.normal(kw, (fan_in, fan_out), jnp.float32) * 0.02
        b = jax.random.normal(kb, (1, fan_out), jnp.float32) * 0.02
        return (w * w_scale).astype(jnp.bfloat16), b * w_scale

    keys = jax.random.split(key, 1 + W)
    emb = dense(keys[0], E, H)

    names = ["qkv_w", "qkv_b", "ao_w", "ao_b", "al_g", "al_b",
             "f_w", "f_b", "fo_w", "fo_b", "fl_g", "fl_b"]
    stacks = {n: [] for n in names}
    for wi in range(W):
        kk = jax.random.split(keys[1 + wi], 6)
        qw, qb = dense(kk[0], H, H, w_scale=q_scale)   # softmax scale folded into Q
        kw_, kb_ = dense(kk[1], H, H)
        vw, vb = dense(kk[2], H, H)
        stacks["qkv_w"].append(jnp.concatenate([qw, kw_, vw], axis=1))
        stacks["qkv_b"].append(jnp.concatenate([qb, kb_, vb], axis=1))
        ao_w, ao_b = dense(kk[3], H, H)
        stacks["ao_w"].append(ao_w)
        stacks["ao_b"].append(ao_b)
        stacks["al_g"].append(jnp.ones((1, H), jnp.float32))
        stacks["al_b"].append(jnp.zeros((1, H), jnp.float32))
        f_w, f_b = dense(kk[4], H, I)
        stacks["f_w"].append(f_w)
        stacks["f_b"].append(f_b)
        fo_w, fo_b = dense(kk[5], I, H)
        stacks["fo_w"].append(fo_w)
        stacks["fo_b"].append(fo_b)
        stacks["fl_g"].append(jnp.ones((1, H), jnp.float32))
        stacks["fl_b"].append(jnp.zeros((1, H), jnp.float32))
    stack = {n: jnp.stack(v, axis=0) for n, v in stacks.items()}
    return {"emb_map": emb, "stack": stack}


# --------------------------------------------------------------------------
# AlbertTransformer forward (output_hidden_states=False, output_attentions=False)
# --------------------------------------------------------------------------
def albert_transformer_forward(hidden_states, attention_mask, params, cfg):
    """hidden_states: (B, S, embedding_size); attention_mask: (B, 1, 1, S) additive."""
    B, S, _ = hidden_states.shape
    mask_add = attention_mask.reshape(B, 1, S).astype(jnp.float32)
    h = embedding_mapping(hidden_states, *params["emb_map"])   # embedding_hidden_mapping_in
    h = albert_layer_stack(h, mask_add, params["stack"], cfg)  # all layers, fused
    return (h,)


# --------------------------------------------------------------------------
# Pure-JAX reference (same params, f32 math) for a loose correctness check
# --------------------------------------------------------------------------
def albert_reference(hidden_states, attention_mask, params, cfg):
    H = cfg["hidden_size"]
    nH = cfg["num_attention_heads"]
    Dh = H // nH
    eps = cfg["layer_norm_eps"]
    B, S, _ = hidden_states.shape

    w_emb, b_emb = params["emb_map"]
    h = hidden_states.astype(jnp.float32) @ w_emb.astype(jnp.float32) + b_emb
    mask = attention_mask.reshape(B, 1, 1, S).astype(jnp.float32)
    st = {k: v.astype(jnp.float32) for k, v in params["stack"].items()}

    widx = _layer_weight_table(cfg)
    for l in range(int(widx.shape[0])):
        wi = int(widx[l])
        qkv = h @ st["qkv_w"][wi] + st["qkv_b"][wi]
        q = qkv[..., :H].reshape(B, S, nH, Dh).transpose(0, 2, 1, 3)
        k = qkv[..., H:2 * H].reshape(B, S, nH, Dh).transpose(0, 2, 1, 3)
        v = qkv[..., 2 * H:].reshape(B, S, nH, Dh).transpose(0, 2, 1, 3)
        s = jnp.einsum("bhqd,bhkd->bhqk", q, k) + mask   # scale already folded into Q
        p = jax.nn.softmax(s, axis=-1)
        ctx = jnp.einsum("bhqk,bhkd->bhqd", p, v).transpose(0, 2, 1, 3).reshape(B, S, H)
        proj = ctx @ st["ao_w"][wi] + st["ao_b"][wi]
        attn = _layernorm_f32(proj + h, st["al_g"][wi], st["al_b"][wi], eps)
        y = attn @ st["f_w"][wi] + st["f_b"][wi]
        y = _gelu_new_f32(y)
        y = y @ st["fo_w"][wi] + st["fo_b"][wi]
        h = _layernorm_f32(y + attn, st["fl_g"][wi], st["fl_b"][wi], eps)
    return h


# --------------------------------------------------------------------------
if __name__ == "__main__":
    cfg = dict(
        embedding_size=32,
        hidden_size=128,
        num_attention_heads=4,
        intermediate_size=256,
        num_hidden_layers=3,
        num_hidden_groups=1,
        inner_group_num=1,
        hidden_act="gelu_new",
        layer_norm_eps=1e-12,
    )

    key = jax.random.PRNGKey(0)
    k_par, k_x = jax.random.split(key)
    params = make_params(k_par, cfg)

    B, S = 2, 16
    hidden_states = jax.random.normal(k_x, (B, S, cfg["embedding_size"]), jnp.float32)
    # extended additive attention mask (all positions attended -> zeros)
    attention_mask = jnp.zeros((B, 1, 1, S), jnp.float32)

    out = albert_transformer_forward(hidden_states, attention_mask, params, cfg)
    jax.block_until_ready(out)

    assert out[0].shape == (B, S, cfg["hidden_size"])
    assert bool(jnp.all(jnp.isfinite(out[0])))

    ref = albert_reference(hidden_states, attention_mask, params, cfg)
    max_err = float(jnp.max(jnp.abs(out[0] - ref)))
    # bf16 MXU operands vs f32 reference -> loose tolerance
    assert max_err < 1e-1, f"kernel/reference mismatch: max abs err {max_err}"

    print("KERNEL_OK")
</pallas_src>

<mosaic_0001>
module attributes {stable_mosaic.version = 11 : i64} {
  func.func @_emb_map_kernel(%arg0: i32, %arg1: memref<1x16x32xf32, #tpu.memory_space<vmem>>, %arg2: memref<32x128xbf16, #tpu.memory_space<vmem>>, %arg3: memref<1x128xf32, #tpu.memory_space<vmem>>, %arg4: memref<1x16x128xf32, #tpu.memory_space<vmem>>) attributes {dimension_semantics = [#tpu.dimension_semantics<parallel>], iteration_bounds = array<i64: 2>, scalar_prefetch = 0 : i64, scratch_operands = 0 : i64, tpu.core_type = #tpu.core_type<tc>, window_params = [{transform_indices = @transform_0, window_bounds = array<i64: 1, 16, 32>}, {pipeline_mode = #tpu.pipeline_mode<synchronous>, transform_indices = @transform_1, window_bounds = array<i64: 32, 128>}, {pipeline_mode = #tpu.pipeline_mode<synchronous>, transform_indices = @transform_2, window_bounds = array<i64: 1, 128>}, {transform_indices = @transform_3, window_bounds = array<i64: 1, 16, 128>}]} {
    %c0 = arith.constant 0 : index
    %c0_0 = arith.constant 0 : index
    %c0_1 = arith.constant 0 : index
    %0 = vector.load %arg1[%c0, %c0_0, %c0_1] : memref<1x16x32xf32, #tpu.memory_space<vmem>>, vector<1x16x32xf32>
    %1 = vector.shape_cast %0 : vector<1x16x32xf32> to vector<16x32xf32>
    %2 = arith.truncf %1 : vector<16x32xf32> to vector<16x32xbf16>
    %c0_2 = arith.constant 0 : index
    %c0_3 = arith.constant 0 : index
    %3 = vector.load %arg2[%c0_2, %c0_3] : memref<32x128xbf16, #tpu.memory_space<vmem>>, vector<32x128xbf16>
    %cst = arith.constant dense<0.000000e+00> : vector<16x128xf32>
    %4 = tpu.matmul %2, %3, %cst {dimension_numbers = #tpu.dot_dimension_numbers<[1], [0], [0], [1], [0, 0, 1, 1], [], []>} : vector<16x32xbf16>, vector<32x128xbf16>, vector<16x128xf32> -> vector<16x128xf32>
    %c0_4 = arith.constant 0 : index
    %c0_5 = arith.constant 0 : index
    %5 = vector.load %arg3[%c0_4, %c0_5] : memref<1x128xf32, #tpu.memory_space<vmem>>, vector<1x128xf32>
    %6 = vector.broadcast %5 : vector<1x128xf32> to vector<16x128xf32>
    %7 = arith.addf %4, %6 : vector<16x128xf32>
    %c0_6 = arith.constant 0 : index
    %c0_7 = arith.constant 0 : index
    %c0_8 = arith.constant 0 : index
    %8 = vector.load %arg4[%c0_6, %c0_7, %c0_8] : memref<1x16x128xf32, #tpu.memory_space<vmem>>, vector<1x16x128xf32>
    %9 = vector.shape_cast %8 : vector<1x16x128xf32> to vector<16x128xf32>
    %10 = vector.shape_cast %7 : vector<16x128xf32> to vector<1x16x128xf32>
    tpu.vector_store %arg4[%c0_6, %c0_7, %c0_8], %10 {strides = array<i32>} : memref<1x16x128xf32, #tpu.memory_space<vmem>>, vector<1x16x128xf32>,
    return
  }
  func.func @transform_0(%arg0: i32) -> (i32, i32, i32) {
    %c0_i32 = arith.constant 0 : i32
    %c0_i32_0 = arith.constant 0 : i32
    %c0_i32_1 = arith.constant 0 : i32
    return %arg0, %c0_i32, %c0_i32_0 : i32, i32, i32
  }
  func.func @transform_1(%arg0: i32) -> (i32, i32) {
    %c0_i32 = arith.constant 0 : i32
    %c0_i32_0 = arith.constant 0 : i32
    %c0_i32_1 = arith.constant 0 : i32
    return %c0_i32, %c0_i32_0 : i32, i32
  }
  func.func @transform_2(%arg0: i32) -> (i32, i32) {
    %c0_i32 = arith.constant 0 : i32
    %c0_i32_0 = arith.constant 0 : i32
    %c0_i32_1 = arith.constant 0 : i32
    return %c0_i32, %c0_i32_0 : i32, i32
  }
  func.func @transform_3(%arg0: i32) -> (i32, i32, i32) {
    %c0_i32 = arith.constant 0 : i32
    %c0_i32_0 = arith.constant 0 : i32
    %c0_i32_1 = arith.constant 0 : i32
    return %arg0, %c0_i32, %c0_i32_0 : i32, i32, i32
  }
}

</mosaic_0001>

<llo_original>
// kernel: tpu_custom_call.1
$region0: #{tpu_custom_call.1}
  #allocation0 [shape = 'u32[]', space=smem, size = 0x4, offset = 0x4, fixed_abs, tag = 'smem constant byte address 0x4 - core index']
  #allocation1 [shape = 'u32[144,128]{1,0:T(1,128)}', space=vmem, size = 0x12000, scoped, tag = 'internal scratch']
  %s0 = inlined_call_operand.hbm [shape: f32[2,16,32], index: 0, kind: input, shape index: {}]
  %s1 = inlined_call_operand.hbm [shape: bf16[32,128], index: 1, kind: input, shape index: {}]
  %s2 = inlined_call_operand.vmem [shape: f32[1,128], index: 2, kind: input, shape index: {}]
  %s3 = inlined_call_operand.hbm [shape: f32[2,16,128], index: 3, kind: output, shape index: {}]
  %s4 = sld [smem:[#allocation0]]
  $region53: #{tpu_custom_call.1} parent=0
    _
  %s6 = ssub.s32 1, %s4
  %s7 = scalar_select 0, %s6, %s4
  $region1: #{tpu_custom_call.1} parent=0
    #allocation2 [shape = 'u8[16384]{0}', space=vmem, size = 0x4000, scoped, tag = 'input window, operand 0']
    #allocation3 [shape = 's32[2]{0}', space=sflag, size = 0x8, scoped, tag = 'scoped memory for tpu_custom_call.1']
    #allocation4 [shape = 's32[2]{0}', space=sflag, size = 0x8, scoped, tag = 'scoped memory for tpu_custom_call.1']
    #allocation5 [shape = 'u8[8192]{0}', space=vmem, size = 0x2000, scoped, tag = 'input window, operand 1, single buffered']
    #allocation6 [shape = 's32[1]{0}', space=sflag, size = 0x4, scoped, tag = 'scoped memory for tpu_custom_call.1']
    #allocation7 [shape = 'u8[16384]{0}', space=vmem, size = 0x4000, scoped, tag = 'output window, operand 0']
    %8 = vsyncpa [#allocation3], 0
    %s9 = scalar_lea.sflag [#allocation3], 1
    %10 = vsyncpa %s9, 0
    %11 = vsyncpa [#allocation6], 0
    %12 = vsyncpa [#allocation4], 0
    %s13 = scalar_lea.sflag [#allocation4], 1
    %14 = vsyncpa %s13, 0
    loop: start=0, step=1, limit=4
    $region2: #{tpu_custom_call.1} parent=1 // loop_pre_header
      _
    $region3: #{tpu_custom_call.1} parent=1 // loop_header
      %s16 = sphi 0, %s20
      %p17 = scmp.ge.s32.totalorder %s16, 4
      %s26 = sphi 0, %s28
      %s29 = sphi 0, %s26
      %s30 = sphi 0, %s29
      %s46 = sphi 0, %s30
      %s50 = sphi 0, %s50
      %s52 = sphi 0, %s50
      %s53 = sphi 0, %s52
      %s67 = sphi 0, %s53
      %s71 = sphi 0, %s71
      %s73 = sphi 0, %s71
      %s74 = sphi 0, %s73
      %s88 = sphi 0, %s74
      %s94 = sphi 0, %s96
      %s97 = sphi 0, %s94
      %s98 = sphi 0, %s97
      %s114 = sphi 0, %s98
    $region4: #{tpu_custom_call.1} parent=1 // loop_header_branch
      %19 = sbr.rel (%p17) target = $region8
    $region5: #{tpu_custom_call.1} parent=1 // loop_body
      %s21 = ssub.s32 %s16, 1
      %s22 = ssub.s32 %s16, 2
      %s23 = sadd.s32 %s16, 1
      %s24 = ssub.s32 %s16, %s23
      %p25 = scmp.eq.s32.totalorder %s24, 0
      %s27 = sadd.s32 %s26, 1
      %s28 = scalar_select %p25, %s26, %s27
      %p31 = pneg %p25
      %p32 = scmp.eq.s32.totalorder %s16, 1
      %p33 = por %p31, %p32
      %p34 = scmp.ne.s32.totalorder %s26, %s29
      %p35 = scmp.eq.s32.totalorder %s16, 0
      %p36 = por %p34, %p35
      %p37 = scmp.ne.s32.totalorder %s26, %s29
      %p38 = scmp.eq.s32.totalorder %s21, 1
      %p39 = por %p37, %p38
      %p40 = scmp.ne.s32.totalorder %s29, %s30
      %p41 = scmp.eq.s32.totalorder %s21, 0
      %p42 = por %p40, %p41
      %p43 = scmp.ne.s32.totalorder %s29, %s30
      %p44 = scmp.eq.s32.totalorder %s22, 1
      %p45 = por %p43, %p44
      %p47 = scmp.ne.s32.totalorder %s30, %s46
      %p48 = scmp.eq.s32.totalorder %s22, 0
      %p49 = por %p47, %p48
      %s51 = sadd.s32 %s50, 1
      %p54 = scmp.eq.s32.totalorder %s16, 1
      %p55 = scmp.ne.s32.totalorder %s50, %s52
      %p56 = scmp.eq.s32.totalorder %s16, 0
      %p57 = por %p55, %p56
      %p58 = scmp.ne.s32.totalorder %s50, %s52
      %p59 = scmp.eq.s32.totalorder %s21, 1
      %p60 = por %p58, %p59
      %p61 = scmp.ne.s32.totalorder %s52, %s53
      %p62 = scmp.eq.s32.totalorder %s21, 0
      %p63 = por %p61, %p62
      %p64 = scmp.ne.s32.totalorder %s52, %s53
      %p65 = scmp.eq.s32.totalorder %s22, 1
      %p66 = por %p64, %p65
      %p68 = scmp.ne.s32.totalorder %s53, %s67
      %p69 = scmp.eq.s32.totalorder %s22, 0
      %p70 = por %p68, %p69
      %s72 = sadd.s32 %s71, 1
      %p75 = scmp.eq.s32.totalorder %s16, 1
      %p76 = scmp.ne.s32.totalorder %s71, %s73
      %p77 = scmp.eq.s32.totalorder %s16, 0
      %p78 = por %p76, %p77
      %p79 = scmp.ne.s32.totalorder %s71, %s73
      %p80 = scmp.eq.s32.totalorder %s21, 1
      %p81 = por %p79, %p80
      %p82 = scmp.ne.s32.totalorder %s73, %s74
      %p83 = scmp.eq.s32.totalorder %s21, 0
      %p84 = por %p82, %p83
      %p85 = scmp.ne.s32.totalorder %s73, %s74
      %p86 = scmp.eq.s32.totalorder %s22, 1
      %p87 = por %p85, %p86
      %p89 = scmp.ne.s32.totalorder %s74, %s88
      %p90 = scmp.eq.s32.totalorder %s22, 0
      %p91 = por %p89, %p90
      %s92 = ssub.s32 %s16, %s23
      %p93 = scmp.eq.s32.totalorder %s92, 0
      %s95 = sadd.s32 %s94, 1
      %s96 = scalar_select %p93, %s94, %s95
      %p99 = pneg %p93
      %p100 = scmp.eq.s32.totalorder %s16, 1
      %p101 = por %p99, %p100
      %p102 = scmp.ne.s32.totalorder %s94, %s97
      %p103 = scmp.eq.s32.totalorder %s16, 0
      %p104 = por %p102, %p103
      %p105 = scmp.ne.s32.totalorder %s94, %s97
      %p106 = scmp.eq.s32.totalorder %s21, 1
      %p107 = por %p105, %p106
      %p108 = scmp.ne.s32.totalorder %s97, %s98
      %p109 = scmp.eq.s32.totalorder %s21, 0
      %p110 = por %p108, %p109
      %p111 = scmp.ne.s32.totalorder %s97, %s98
      %p112 = scmp.eq.s32.totalorder %s22, 1
      %p113 = por %p111, %p112
      %p115 = scmp.ne.s32.totalorder %s98, %s114
      %p116 = scmp.eq.s32.totalorder %s22, 0
      %p117 = por %p115, %p116
      %p118 = scmp.le.s32.totalorder 1, %s16
      %p119 = scmp.lt.s32.totalorder %s16, 3
      %p120 = pnand %p118, %p119
      %p121 = pneg %p120
      // Predicated region
      $region9: #{tpu_custom_call.1} parent=5 // pred_check
        _
      $region10: #{tpu_custom_call.1} parent=5 // pred_check_branch
        %123 = sbr.rel (%p120) target = $region12
      $region11: #{tpu_custom_call.1} parent=5 // pred_region
        %s124 = ssub.s32 %s16, 1
        // Predicated region
        $region13: #{tpu_custom_call.1} parent=11 // pred_check
          %p125 = pneg %p63
        $region14: #{tpu_custom_call.1} parent=11 // pred_check_branch
          %127 = sbr.rel (%p125) target = $region16
        $region15: #{tpu_custom_call.1} parent=11 // pred_region
          %s129 = ssub.s32 256, 256
          %130 = vsyncadd [#allocation6], %s129
          %s131 = sshll.u32 [#allocation5], 4
          %s132 = int_to_ptr.vmem [resolvable:$true] %s131
          %137 = dma.hbm_to_vmem [thread:$0]  %s1, 256, %s132, [#allocation6], 64, 64, 4
        $region16: #{tpu_custom_call.1} parent=11 // pred_fallthru
          _
        // Predicated region
        $region17: #{tpu_custom_call.1} parent=11 // pred_check
          %p138 = pneg %p84
        $region18: #{tpu_custom_call.1} parent=11 // pred_check_branch
          %140 = sbr.rel (%p138) target = $region20
        $region19: #{tpu_custom_call.1} parent=11 // pred_region
          _
        $region20: #{tpu_custom_call.1} parent=11 // pred_fallthru
          _
      $region12: #{tpu_custom_call.1} parent=5 // pred_fallthru
        _
      %p141 = scmp.lt.s32.totalorder %s16, 2
      // Predicated region
      $region21: #{tpu_custom_call.1} parent=5 // pred_check
        %p142 = pneg %p141
      $region22: #{tpu_custom_call.1} parent=5 // pred_check_branch
        %144 = sbr.rel (%p142) target = $region24
      $region23: #{tpu_custom_call.1} parent=5 // pred_region
        // Predicated region
        $region25: #{tpu_custom_call.1} parent=23 // pred_check
          %p145 = pneg %p36
        $region26: #{tpu_custom_call.1} parent=23 // pred_check_branch
          %147 = sbr.rel (%p145) target = $region28
        $region27: #{tpu_custom_call.1} parent=23 // pred_region
          %s148 = sand.u32 %s26, 1
          %s149 = scalar_lea.sflag [#allocation3], %s148
          %s150 = sand.u32 %s26, 1
          %s151 = smul.addr %s150, 16
          %s152 = scalar_lea.vmem [#allocation2], %s151
          %s154 = ssub.s32 256, 256
          %155 = vsyncadd %s149, %s154
          %s156 = smul.addr %s16, 2
          %s157 = smul.addr %s156, 128
          %s158 = scalar_lea.hbm %s0, %s157
          %s159 = sshll.u32 %s152, 4
          %s160 = int_to_ptr.vmem [resolvable:$true] %s159
          %165 = dma.hbm_to_vmem [thread:$0]  %s158, 256, %s160, %s149, 128, 128, 8
        $region28: #{tpu_custom_call.1} parent=23 // pred_fallthru
          _
      $region24: #{tpu_custom_call.1} parent=5 // pred_fallthru
        _
      %p166 = scmp.le.s32.totalorder 1, %s16
      %p167 = scmp.lt.s32.totalorder %s16, 3
      %p168 = pnand %p166, %p167
      %p169 = pneg %p168
      // Predicated region
      $region29: #{tpu_custom_call.1} parent=5 // pred_check
        _
      $region30: #{tpu_custom_call.1} parent=5 // pred_check_branch
        %171 = sbr.rel (%p168) target = $region32
      $region31: #{tpu_custom_call.1} parent=5 // pred_region
        %s172 = ssub.s32 %s16, 1
        %s173 = sand.u32 %s29, 1
        %s174 = scalar_lea.sflag [#allocation3], %s173
        %s175 = sand.u32 %s29, 1
        %s176 = smul.addr %s175, 16
        %s177 = scalar_lea.vmem [#allocation2], %s176
        // Predicated region
        $region33: #{tpu_custom_call.1} parent=31 // pred_check
          %p178 = pneg %p42
        $region34: #{tpu_custom_call.1} parent=31 // pred_check_branch
          %180 = sbr.rel (%p178) target = $region36
        $region35: #{tpu_custom_call.1} parent=31 // pred_region
          %181 = dma.done %s174, 256
        $region36: #{tpu_custom_call.1} parent=31 // pred_fallthru
          _
        // Predicated region
        $region37: #{tpu_custom_call.1} parent=31 // pred_check
          %p182 = pneg %p63
        $region38: #{tpu_custom_call.1} parent=31 // pred_check_branch
          %184 = sbr.rel (%p182) target = $region40
        $region39: #{tpu_custom_call.1} parent=31 // pred_region
          %185 = dma.done [#allocation6], 256
        $region40: #{tpu_custom_call.1} parent=31 // pred_fallthru
          _
        %s186 = sand.u32 %s29, 1
        %s187 = scalar_lea.sflag [#allocation3], %s186
        %s188 = sand.u32 %s29, 1
        %s189 = smul.addr %s188, 16
        %s190 = scalar_lea.vmem [#allocation2], %s189
        %p191 = pneg %p42
        %p192 = pneg %p39
        %p193 = pneg %p63
        %p194 = pneg %p60
        %p195 = pneg %p84
        %p196 = pneg %p81
        %p197 = pneg %p110
        %p198 = pneg %p107
        %s199 = sand.u32 %s97, 1
        %s200 = scalar_lea.sflag [#allocation4], %s199
        %s201 = sand.u32 %s97, 1
        %s202 = smul.addr %s201, 16
        %s203 = scalar_lea.vmem [#allocation7], %s202
        %v205 = vld [vmem:[%s177] sm:$0xff]
        %v206 = vld [vmem:[%s177 + $0x8] sm:$0xff]
        %v207 = vpack.c.bf16 %v206, %v205
        %v208 = vld [vmem:[#allocation5] sm:$0xf]
        %v209 = vld [vmem:[#allocation5 + $0x4] sm:$0xf]
        %v210 = vld [vmem:[#allocation5 + $0x8] sm:$0xf]
        %v211 = vld [vmem:[#allocation5 + $0xc] sm:$0xf]
        %v212 = vld [vmem:[%s2] sm:$0x1]
        %v214 = vlaneseq
        %v215 = vshrl.u32 %v214, 7
        %v216 = vsub.s32 0, %v215
        %v217 = vrot.slane %v212, %v216
        %v223 = vunpack.c.l.b16 %v208
        %v224 = vunpack.c.l.b16 %v209
        %v225 = vunpack.c.l.b16 %v210
        %v226 = vunpack.c.l.b16 %v211
        %v227 = vpack.c.b16 %v224, %v223
        %v228 = vpack.c.b16 %v226, %v225
        %vm231 = vcmask 261120
        %v233 = vsel %vm231, %v207, 0
        %235 = vmatprep.subr.bf16.mxu0 0
        %236 = vmatpush1.bf16.msra.mxu0 %v227
        %237 = vmatprep.subr.bf16.mxu0 0
        %238 = vmatpush1.bf16.msra.mxu0 %v228
        %239 = vmatprep.subr.bf16.mxu0 0
        %240 = vmatpush1.bf16.msra.mxu0 0
        %241 = vmatprep.subr.bf16.mxu0 0
        %242 = vmatpush1.bf16.msra.mxu0 0
        %243 = vmatprep.subr.bf16.mxu0 0
        %244 = vmatpush1.bf16.msra.mxu0 0
        %245 = vmatprep.subr.bf16.mxu0 0
        %246 = vmatpush1.bf16.msra.mxu0 0
        %247 = vmatprep.subr.bf16.mxu0 0
        %248 = vmatpush1.bf16.msra.mxu0 0
        %249 = vmatprep.subr.bf16.mxu0 0
        %250 = vmatpush1.bf16.msra.mxu0 0
        %251 = vmatprep.subr.bf16.mxu0 0
        %252 = vmatpush1.bf16.msra.mxu0 0
        %253 = vmatprep.subr.bf16.mxu0 0
        %254 = vmatpush1.bf16.msra.mxu0 0
        %255 = vmatprep.subr.bf16.mxu0 0
        %256 = vmatpush1.bf16.msra.mxu0 0
        %257 = vmatprep.subr.bf16.mxu0 0
        %258 = vmatpush1.bf16.msra.mxu0 0
        %259 = vmatprep.subr.bf16.mxu0 0
        %260 = vmatpush1.bf16.msra.mxu0 0
        %261 = vmatprep.subr.bf16.mxu0 0
        %262 = vmatpush1.bf16.msra.mxu0 0
        %263 = vmatprep.subr.bf16.mxu0 0
        %264 = vmatpush1.bf16.msra.mxu0 0
        %265 = vmatprep.subr.bf16.mxu0 0
        %266 = vmatpush1.bf16.msra.mxu0 0
        %267 = vmatprep.mubr.bf16.mxu0 0
        %268 = vmatmul.mubr.bf16.gmra.mrb[0].mxu0 %v233
        %v269 = vpop.f32.mrb[0].mxu0
        %v270 = vadd.f32 %v217, %v269
        %v271 = vpop.f32.mrb[0].mxu0
        %v272 = vpop.f32.mrb[0].mxu0
        %v273 = vadd.f32 %v217, %v272
        %v274 = vpop.f32.mrb[0].mxu0
        %275 = vdwg.mxu0
        %276 = vst [vmem:[%s203] sm:$0xff] %v270
        %277 = vst [vmem:[%s203 + $0x8] sm:$0xff] %v273
        %s278 = sand.u32 %s97, 1
        %s279 = scalar_lea.sflag [#allocation4], %s278
        %s280 = sand.u32 %s97, 1
        %s281 = smul.addr %s280, 16
        %s282 = scalar_lea.vmem [#allocation7], %s281
        // Predicated region
        $region41: #{tpu_custom_call.1} parent=31 // pred_check
          %p283 = pneg %p107
        $region42: #{tpu_custom_call.1} parent=31 // pred_check_branch
          %285 = sbr.rel (%p283) target = $region44
        $region43: #{tpu_custom_call.1} parent=31 // pred_region
          %s287 = ssub.s32 256, 256
          %288 = vsyncadd %s279, %s287
          %s289 = smul.addr %s21, 2
          %s290 = smul.addr %s289, 128
          %s291 = scalar_lea.hbm %s3, %s290
          %s292 = sshll.u32 %s282, 4
          %s293 = int_to_ptr.vmem [resolvable:$true] %s292
          %298 = dma.vmem_to_hbm [thread:$0]  %s293, 256, %s291, %s279, 128, 128, 8
        $region44: #{tpu_custom_call.1} parent=31 // pred_fallthru
          _
      $region32: #{tpu_custom_call.1} parent=5 // pred_fallthru
        _
      %p299 = scmp.le.s32.totalorder 2, %s16
      // Predicated region
      $region45: #{tpu_custom_call.1} parent=5 // pred_check
        %p300 = pneg %p299
      $region46: #{tpu_custom_call.1} parent=5 // pred_check_branch
        %302 = sbr.rel (%p300) target = $region48
      $region47: #{tpu_custom_call.1} parent=5 // pred_region
        %s303 = ssub.s32 %s16, 2
        // Predicated region
        $region49: #{tpu_custom_call.1} parent=47 // pred_check
          %p304 = pneg %p113
        $region50: #{tpu_custom_call.1} parent=47 // pred_check_branch
          %306 = sbr.rel (%p304) target = $region52
        $region51: #{tpu_custom_call.1} parent=47 // pred_region
          %s307 = sand.u32 %s98, 1
          %s308 = scalar_lea.sflag [#allocation4], %s307
          %s309 = sand.u32 %s98, 1
          %s310 = smul.addr %s309, 16
          %s311 = scalar_lea.vmem [#allocation7], %s310
          %312 = dma.done %s308, 256
        $region52: #{tpu_custom_call.1} parent=47 // pred_fallthru
          _
      $region48: #{tpu_custom_call.1} parent=5 // pred_fallthru
        _
    $region6: #{tpu_custom_call.1} parent=1 // loop_footer
      %s20 = sadd.s32 1, %s16
    $region7: #{tpu_custom_call.1} parent=1 // loop_footer_branch
      %15 = sbr.rel target = $region3
    $region8: #{tpu_custom_call.1} parent=1 // loop_exit
      _
    %313 = vsyncpa [#allocation3], 1
    %s314 = scalar_lea.sflag [#allocation3], 1
    %315 = vsyncpa %s314, 1
    %316 = vsyncpa [#allocation6], 1
    %317 = vsyncpa [#allocation4], 1
    %s318 = scalar_lea.sflag [#allocation4], 1
    %319 = vsyncpa %s318, 1

</llo_original>
